<compile_context>
chip_gen: v7x
topology: tpu7x:2x2x1
jax: 0.10.0
libtpu: 0.0.40
codegen_flags: <defaults>
</compile_context>

<pallas_src>
from functools import partial

import jax
import jax.numpy as jnp
from jax.experimental import pallas as pl
from jax.experimental.pallas import tpu as pltpu


def _silu(x):
    # x * sigmoid(x) with sigmoid(x) = 0.5 * (tanh(x/2) + 1): the transcendental
    # lands on the EUP slot, the mul/add on the VALU — no f32 divide sequence.
    return x * (0.5 * jnp.tanh(0.5 * x) + 0.5)


def mlp_kernel(x_ref, *refs, matmul_dtype):
    """Fused MLP forward.

    refs = (w0, b0, w1, b1, ..., wL, bL, out_ref)
      x_ref : [tile_b, input_dim]   natural layout (ragged tail rows may hold
                                    unspecified data; columns never mix, and the
                                    corresponding output rows are dropped)
      w_i   : hidden layers in PyTorch layout [out_d, in_d]; the LAST weight is
              pre-transposed to [in_d, out_d]
      b_i   : hidden biases as [out_d, 1]; the LAST bias as [1, out_d]
      out   : [tile_b, output_dim]  natural layout
    Hidden layers get SiLU, the final layer is linear.
    """
    out_ref = refs[-1]
    prm = refs[:-1]
    n_layers = len(prm) // 2

    def dg(a, b, dims):
        # bf16-in / f32-accumulate MXU matmul (or pure f32 when disabled).
        return jax.lax.dot_general(
            a.astype(matmul_dtype), b.astype(matmul_dtype),
            dimension_numbers=(dims, ((), ())),
            preferred_element_type=jnp.float32)

    x = x_ref[...]                                        # [tile_b, in_dim]

    if n_layers == 1:
        w, b = prm[0][...], prm[1][...]                   # [in, out], [1, out]
        out = dg(x, w, ((1,), (0,))) + b                  # [tile_b, out]
    else:
        # Layer 0: contract both feature axes (q.k^T pattern) -> transposed
        # domain, batch on the 128-wide lane axis.
        w, b = prm[0][...], prm[1][...]                   # [h0, in], [h0, 1]
        h = _silu(dg(w, x, ((1,), (1,))) + b)             # [h0, tile_b]

        # Middle hidden layers: standard matmul in the transposed domain.
        for l in range(1, n_layers - 1):
            w, b = prm[2 * l][...], prm[2 * l + 1][...]   # [h_l, h_{l-1}], [h_l, 1]
            h = _silu(dg(w, h, ((1,), (0,))) + b)         # [h_l, tile_b]

        # Final layer: contract dim-0 of both operands ("dv" pattern) so the
        # result is already in natural [tile_b, out] layout — no transpose.
        w, b = prm[-2][...], prm[-1][...]                 # [h_last, out], [1, out]
        out = dg(h, w, ((0,), (0,))) + b                  # [tile_b, out]

    out_ref[...] = out.astype(out_ref.dtype)


def _cdiv(a, b):
    return (a + b - 1) // b


def _round_up(a, m):
    return _cdiv(a, m) * m


def _prep_params(params):
    """Kernel-facing parameter layout (tiny, parameter-sized ops only)."""
    n = len(params)
    flat, specs = [], []
    for li, (w, b) in enumerate(params):
        if li == n - 1:
            wk = w.T                           # [in_last, out]
            bk = b.reshape(1, -1)              # [1, out]
        else:
            wk = w                             # [out, in]  (PyTorch layout)
            bk = b.reshape(-1, 1)              # [out, 1]
        flat += [wk, bk]
        # Full-block, constant index_map -> stays VMEM-resident across steps.
        specs += [pl.BlockSpec(wk.shape, lambda i: (0, 0)),
                  pl.BlockSpec(bk.shape, lambda i: (0, 0))]
    return flat, specs


def mlp_forward(x, params, *, tile_b_max=2048, use_bf16_matmul=True):
    """Forward pass.

    x:      [batch, input_dim] float32
    params: list of (w, b) with w shaped [out_dim, in_dim], b shaped [out_dim]
    returns [batch, output_dim] float32
    """
    batch, input_dim = x.shape
    out_dim = params[-1][0].shape[0]

    # Batch tile: prefer a multiple of 128 (lane width after the in-kernel
    # re-orientation), amortizing the ~0.35 us/step grid overhead.
    tile_b = min(tile_b_max, _round_up(batch, 128))
    if batch >= 256:
        # Guarantee >= 2 grid steps so both v7x TensorCores get work.
        tile_b = min(tile_b, _round_up(_cdiv(batch, 2), 128))
    # Never make the tile (much) larger than the array; keeps small-batch
    # cases to a single exact block.  Must stay a multiple of 8 (sublane).
    tile_b = min(tile_b, _round_up(batch, 8))
    num_blocks = _cdiv(batch, tile_b)

    flat, p_specs = _prep_params(params)
    in_specs = [pl.BlockSpec((tile_b, input_dim), lambda i: (i, 0))] + p_specs
    out_spec = pl.BlockSpec((tile_b, out_dim), lambda i: (i, 0))

    kernel = partial(
        mlp_kernel,
        matmul_dtype=jnp.bfloat16 if use_bf16_matmul else jnp.float32)

    return pl.pallas_call(
        kernel,
        out_shape=jax.ShapeDtypeStruct((batch, out_dim), jnp.float32),
        grid=(num_blocks,),
        in_specs=in_specs,
        out_specs=out_spec,
        compiler_params=pltpu.CompilerParams(
            dimension_semantics=("parallel",),
        ),
    )(x, *flat)


def init_params(key, input_dim, hidden_layers, output_dim):
    """Deterministic init mimicking nn.Linear (uniform +- 1/sqrt(in_dim)).

    Weights in PyTorch layout [out_dim, in_dim]; biases as [out_dim].
    """
    dims = [input_dim] + list(hidden_layers) + [output_dim]
    params = []
    for i in range(len(dims) - 1):
        key, kw, kb = jax.random.split(key, 3)
        in_d, out_d = dims[i], dims[i + 1]
        bound = 1.0 / jnp.sqrt(jnp.float32(in_d))
        w = jax.random.uniform(kw, (out_d, in_d), jnp.float32, -bound, bound)
        b = jax.random.uniform(kb, (out_d,), jnp.float32, -bound, bound)
        params.append((w, b))
    return params


def reference_forward(x, params, matmul_dtype=jnp.float32, silu_tanh=False):
    """Pure-JAX reference. With matmul_dtype=bf16 + silu_tanh=True it mirrors
    the kernel's math exactly (tight check); otherwise it is the plain f32
    reference matching the PyTorch module (modulo f64)."""
    h = x
    n = len(params)
    for i, (w, b) in enumerate(params):
        z = jnp.dot(h.astype(matmul_dtype), w.T.astype(matmul_dtype),
                    preferred_element_type=jnp.float32,
                    precision=jax.lax.Precision.HIGHEST) + b
        if i < n - 1:
            h = z * (0.5 * jnp.tanh(0.5 * z) + 0.5) if silu_tanh else jax.nn.silu(z)
        else:
            h = z
    return h


if __name__ == "__main__":
    key = jax.random.PRNGKey(0)

    batch = 8
    input_dim = 4
    hidden_layers = [32, 32]
    output_dim = 3

    key, kx = jax.random.split(key)
    x = jax.random.normal(kx, (batch, input_dim), jnp.float32)
    params = init_params(key, input_dim, hidden_layers, output_dim)

    ref_f32 = reference_forward(x, params)

    # 1) f32-matmul path: tight check against the plain f32 reference.
    out_f32 = jax.block_until_ready(mlp_forward(x, params, use_bf16_matmul=False))
    assert out_f32.shape == (batch, output_dim), out_f32.shape
    assert jnp.allclose(out_f32, ref_f32, atol=1e-4, rtol=1e-4), (
        f"f32 path: max abs err {jnp.max(jnp.abs(out_f32 - ref_f32))}")

    # 2) bf16-matmul path (default / fast): tight against the bf16-matched
    #    reference, loose against the exact f32 reference.
    out_bf16 = jax.block_until_ready(mlp_forward(x, params))
    ref_bf16 = reference_forward(x, params, matmul_dtype=jnp.bfloat16,
                                 silu_tanh=True)
    assert out_bf16.shape == (batch, output_dim), out_bf16.shape
    assert jnp.allclose(out_bf16, ref_bf16, atol=1e-3, rtol=1e-3), (
        f"bf16 path (matched ref): max abs err {jnp.max(jnp.abs(out_bf16 - ref_bf16))}")
    assert jnp.allclose(out_bf16, ref_f32, atol=5e-2, rtol=5e-2), (
        f"bf16 path (f32 ref): max abs err {jnp.max(jnp.abs(out_bf16 - ref_f32))}")

    print("KERNEL_OK")
</pallas_src>

<mosaic_0001>
module attributes {stable_mosaic.version = 11 : i64} {
  func.func @mlp_kernel(%arg0: i32, %arg1: memref<8x4xf32, #tpu.memory_space<vmem>>, %arg2: memref<32x4xf32, #tpu.memory_space<vmem>>, %arg3: memref<32x1xf32, #tpu.memory_space<vmem>>, %arg4: memref<32x32xf32, #tpu.memory_space<vmem>>, %arg5: memref<32x1xf32, #tpu.memory_space<vmem>>, %arg6: memref<32x3xf32, #tpu.memory_space<vmem>>, %arg7: memref<1x3xf32, #tpu.memory_space<vmem>>, %arg8: memref<8x3xf32, #tpu.memory_space<vmem>>) attributes {dimension_semantics = [#tpu.dimension_semantics<parallel>], iteration_bounds = array<i64: 1>, scalar_prefetch = 0 : i64, scratch_operands = 0 : i64, tpu.core_type = #tpu.core_type<tc>, window_params = [{transform_indices = @transform_0, window_bounds = array<i64: 8, 4>}, {pipeline_mode = #tpu.pipeline_mode<synchronous>, transform_indices = @transform_1, window_bounds = array<i64: 32, 4>}, {pipeline_mode = #tpu.pipeline_mode<synchronous>, transform_indices = @transform_2, window_bounds = array<i64: 32, 1>}, {pipeline_mode = #tpu.pipeline_mode<synchronous>, transform_indices = @transform_3, window_bounds = array<i64: 32, 32>}, {pipeline_mode = #tpu.pipeline_mode<synchronous>, transform_indices = @transform_4, window_bounds = array<i64: 32, 1>}, {pipeline_mode = #tpu.pipeline_mode<synchronous>, transform_indices = @transform_5, window_bounds = array<i64: 32, 3>}, {pipeline_mode = #tpu.pipeline_mode<synchronous>, transform_indices = @transform_6, window_bounds = array<i64: 1, 3>}, {transform_indices = @transform_7, window_bounds = array<i64: 8, 3>}]} {
    %c0 = arith.constant 0 : index
    %c0_0 = arith.constant 0 : index
    %0 = vector.load %arg1[%c0, %c0_0] : memref<8x4xf32, #tpu.memory_space<vmem>>, vector<8x4xf32>
    %c0_1 = arith.constant 0 : index
    %c0_2 = arith.constant 0 : index
    %1 = vector.load %arg2[%c0_1, %c0_2] : memref<32x4xf32, #tpu.memory_space<vmem>>, vector<32x4xf32>
    %c0_3 = arith.constant 0 : index
    %c0_4 = arith.constant 0 : index
    %2 = vector.load %arg3[%c0_3, %c0_4] : memref<32x1xf32, #tpu.memory_space<vmem>>, vector<32x1xf32>
    %cst = arith.constant dense<0.000000e+00> : vector<32x8xf32>
    %3 = tpu.matmul %1, %0, %cst {dimension_numbers = #tpu.dot_dimension_numbers<[1], [1], [0], [0], [0, 0, 1, 0], [], []>} : vector<32x4xf32>, vector<8x4xf32>, vector<32x8xf32> -> vector<32x8xf32>
    %4 = vector.broadcast %2 : vector<32x1xf32> to vector<32x8xf32>
    %5 = arith.addf %3, %4 : vector<32x8xf32>
    %cst_5 = arith.constant 5.000000e-01 : f32
    %6 = vector.broadcast %cst_5 : f32 to vector<32x8xf32>
    %7 = arith.mulf %6, %5 : vector<32x8xf32>
    %8 = math.tanh %7 : vector<32x8xf32>
    %cst_6 = arith.constant 5.000000e-01 : f32
    %9 = vector.broadcast %cst_6 : f32 to vector<32x8xf32>
    %10 = arith.mulf %9, %8 : vector<32x8xf32>
    %cst_7 = arith.constant 5.000000e-01 : f32
    %11 = vector.broadcast %cst_7 : f32 to vector<32x8xf32>
    %12 = arith.addf %10, %11 : vector<32x8xf32>
    %13 = arith.mulf %5, %12 : vector<32x8xf32>
    %c0_8 = arith.constant 0 : index
    %c0_9 = arith.constant 0 : index
    %14 = vector.load %arg4[%c0_8, %c0_9] : memref<32x32xf32, #tpu.memory_space<vmem>>, vector<32x32xf32>
    %c0_10 = arith.constant 0 : index
    %c0_11 = arith.constant 0 : index
    %15 = vector.load %arg5[%c0_10, %c0_11] : memref<32x1xf32, #tpu.memory_space<vmem>>, vector<32x1xf32>
    %cst_12 = arith.constant dense<0.000000e+00> : vector<32x8xf32>
    %16 = tpu.matmul %14, %13, %cst_12 {dimension_numbers = #tpu.dot_dimension_numbers<[1], [0], [0], [1], [0, 0, 1, 1], [], []>} : vector<32x32xf32>, vector<32x8xf32>, vector<32x8xf32> -> vector<32x8xf32>
    %17 = vector.broadcast %15 : vector<32x1xf32> to vector<32x8xf32>
    %18 = arith.addf %16, %17 : vector<32x8xf32>
    %cst_13 = arith.constant 5.000000e-01 : f32
    %19 = vector.broadcast %cst_13 : f32 to vector<32x8xf32>
    %20 = arith.mulf %19, %18 : vector<32x8xf32>
    %21 = math.tanh %20 : vector<32x8xf32>
    %cst_14 = arith.constant 5.000000e-01 : f32
    %22 = vector.broadcast %cst_14 : f32 to vector<32x8xf32>
    %23 = arith.mulf %22, %21 : vector<32x8xf32>
    %cst_15 = arith.constant 5.000000e-01 : f32
    %24 = vector.broadcast %cst_15 : f32 to vector<32x8xf32>
    %25 = arith.addf %23, %24 : vector<32x8xf32>
    %26 = arith.mulf %18, %25 : vector<32x8xf32>
    %c0_16 = arith.constant 0 : index
    %c0_17 = arith.constant 0 : index
    %27 = vector.load %arg6[%c0_16, %c0_17] : memref<32x3xf32, #tpu.memory_space<vmem>>, vector<32x3xf32>
    %c0_18 = arith.constant 0 : index
    %c0_19 = arith.constant 0 : index
    %28 = vector.load %arg7[%c0_18, %c0_19] : memref<1x3xf32, #tpu.memory_space<vmem>>, vector<1x3xf32>
    %cst_20 = arith.constant dense<0.000000e+00> : vector<8x3xf32>
    %29 = tpu.matmul %26, %27, %cst_20 {dimension_numbers = #tpu.dot_dimension_numbers<[0], [0], [1], [1], [0, 1, 1, 1], [], []>} : vector<32x8xf32>, vector<32x3xf32>, vector<8x3xf32> -> vector<8x3xf32>
    %30 = vector.broadcast %28 : vector<1x3xf32> to vector<8x3xf32>
    %31 = arith.addf %29, %30 : vector<8x3xf32>
    %c0_21 = arith.constant 0 : index
    %c0_22 = arith.constant 0 : index
    %32 = vector.load %arg8[%c0_21, %c0_22] : memref<8x3xf32, #tpu.memory_space<vmem>>, vector<8x3xf32>
    tpu.vector_store %arg8[%c0_21, %c0_22], %31 {strides = array<i32>} : memref<8x3xf32, #tpu.memory_space<vmem>>, vector<8x3xf32>,
    return
  }
  func.func @transform_0(%arg0: i32) -> (i32, i32) {
    %c0_i32 = arith.constant 0 : i32
    %c0_i32_0 = arith.constant 0 : i32
    return %arg0, %c0_i32 : i32, i32
  }
  func.func @transform_1(%arg0: i32) -> (i32, i32) {
    %c0_i32 = arith.constant 0 : i32
    %c0_i32_0 = arith.constant 0 : i32
    %c0_i32_1 = arith.constant 0 : i32
    return %c0_i32, %c0_i32_0 : i32, i32
  }
  func.func @transform_2(%arg0: i32) -> (i32, i32) {
    %c0_i32 = arith.constant 0 : i32
    %c0_i32_0 = arith.constant 0 : i32
    %c0_i32_1 = arith.constant 0 : i32
    return %c0_i32, %c0_i32_0 : i32, i32
  }
  func.func @transform_3(%arg0: i32) -> (i32, i32) {
    %c0_i32 = arith.constant 0 : i32
    %c0_i32_0 = arith.constant 0 : i32
    %c0_i32_1 = arith.constant 0 : i32
    return %c0_i32, %c0_i32_0 : i32, i32
  }
  func.func @transform_4(%arg0: i32) -> (i32, i32) {
    %c0_i32 = arith.constant 0 : i32
    %c0_i32_0 = arith.constant 0 : i32
    %c0_i32_1 = arith.constant 0 : i32
    return %c0_i32, %c0_i32_0 : i32, i32
  }
  func.func @transform_5(%arg0: i32) -> (i32, i32) {
    %c0_i32 = arith.constant 0 : i32
    %c0_i32_0 = arith.constant 0 : i32
    %c0_i32_1 = arith.constant 0 : i32
    return %c0_i32, %c0_i32_0 : i32, i32
  }
  func.func @transform_6(%arg0: i32) -> (i32, i32) {
    %c0_i32 = arith.constant 0 : i32
    %c0_i32_0 = arith.constant 0 : i32
    %c0_i32_1 = arith.constant 0 : i32
    return %c0_i32, %c0_i32_0 : i32, i32
  }
  func.func @transform_7(%arg0: i32) -> (i32, i32) {
    %c0_i32 = arith.constant 0 : i32
    %c0_i32_0 = arith.constant 0 : i32
    return %arg0, %c0_i32 : i32, i32
  }
}

</mosaic_0001>

<llo_original>
// kernel: tpu_custom_call.1
$region0: #{tpu_custom_call.1}
  #allocation0 [shape = 'u32[]', space=smem, size = 0x4, offset = 0x4, fixed_abs, tag = 'smem constant byte address 0x4 - core index']
  #allocation1 [shape = 'u32[144,128]{1,0:T(1,128)}', space=vmem, size = 0x12000, scoped, tag = 'internal scratch']
  %s0 = inlined_call_operand.vmem [shape: f32[8,4], index: 0, kind: input, shape index: {}]
  %s1 = inlined_call_operand.vmem [shape: f32[32,4], index: 1, kind: input, shape index: {}]
  %s2 = inlined_call_operand.vmem [shape: f32[32,1], index: 2, kind: input, shape index: {}]
  %s3 = inlined_call_operand.vmem [shape: f32[32,32], index: 3, kind: input, shape index: {}]
  %s4 = inlined_call_operand.vmem [shape: f32[32,1], index: 4, kind: input, shape index: {}]
  %s5 = inlined_call_operand.vmem [shape: f32[32,3], index: 5, kind: input, shape index: {}]
  %s6 = inlined_call_operand.vmem [shape: f32[1,3], index: 6, kind: input, shape index: {}]
  %s7 = inlined_call_operand.vmem [shape: f32[8,3], index: 7, kind: output, shape index: {}]
  %s8 = sld [smem:[#allocation0]]
  $region38: #{tpu_custom_call.1} parent=0
    _
  %s10 = ssub.s32 1, %s8
  %s11 = scalar_select 0, %s10, %s8
  // Predicated region
  $region2: #{tpu_custom_call.1} parent=0 // pred_check
    _
  $region3: #{tpu_custom_call.1} parent=0 // pred_check_branch
    %13 = sbr.rel (0) target = $region5
  $region4: #{tpu_custom_call.1} parent=0 // pred_region
    _
  $region5: #{tpu_custom_call.1} parent=0 // pred_fallthru
    _
  // Predicated region
  $region6: #{tpu_custom_call.1} parent=0 // pred_check
    _
  $region7: #{tpu_custom_call.1} parent=0 // pred_check_branch
    %15 = sbr.rel (0) target = $region9
  $region8: #{tpu_custom_call.1} parent=0 // pred_region
    _
  $region9: #{tpu_custom_call.1} parent=0 // pred_fallthru
    _
  // Predicated region
  $region10: #{tpu_custom_call.1} parent=0 // pred_check
    _
  $region11: #{tpu_custom_call.1} parent=0 // pred_check_branch
    %17 = sbr.rel (0) target = $region13
  $region12: #{tpu_custom_call.1} parent=0 // pred_region
    _
  $region13: #{tpu_custom_call.1} parent=0 // pred_fallthru
    _
  // Predicated region
  $region14: #{tpu_custom_call.1} parent=0 // pred_check
    _
  $region15: #{tpu_custom_call.1} parent=0 // pred_check_branch
    %19 = sbr.rel (0) target = $region17
  $region16: #{tpu_custom_call.1} parent=0 // pred_region
    _
  $region17: #{tpu_custom_call.1} parent=0 // pred_fallthru
    _
  // Predicated region
  $region18: #{tpu_custom_call.1} parent=0 // pred_check
    _
  $region19: #{tpu_custom_call.1} parent=0 // pred_check_branch
    %21 = sbr.rel (0) target = $region21
  $region20: #{tpu_custom_call.1} parent=0 // pred_region
    _
  $region21: #{tpu_custom_call.1} parent=0 // pred_fallthru
    _
  // Predicated region
  $region22: #{tpu_custom_call.1} parent=0 // pred_check
    _
  $region23: #{tpu_custom_call.1} parent=0 // pred_check_branch
    %23 = sbr.rel (0) target = $region25
  $region24: #{tpu_custom_call.1} parent=0 // pred_region
    _
  $region25: #{tpu_custom_call.1} parent=0 // pred_fallthru
    _
  // Predicated region
  $region26: #{tpu_custom_call.1} parent=0 // pred_check
    _
  $region27: #{tpu_custom_call.1} parent=0 // pred_check_branch
    %25 = sbr.rel (0) target = $region29
  $region28: #{tpu_custom_call.1} parent=0 // pred_region
    _
  $region29: #{tpu_custom_call.1} parent=0 // pred_fallthru
    _
  %v26 = vld [vmem:[%s0] sm:$0xff]
  %v27 = vld [vmem:[%s1] sm:$0xff]
  %v28 = vld [vmem:[%s1 + $0x8] sm:$0xff]
  %v29 = vld [vmem:[%s1 + $0x10] sm:$0xff]
  %v30 = vld [vmem:[%s1 + $0x18] sm:$0xff]
  %v31 = vld [vmem:[%s2] sm:$0xff]
  %v32 = vld [vmem:[%s2 + $0x8] sm:$0xff]
  %v33 = vld [vmem:[%s2 + $0x10] sm:$0xff]
  %v34 = vld [vmem:[%s2 + $0x18] sm:$0xff]
  %36 = vset.pattern.permute.xlu0 0
  %37 = vperm.xlu0 %36, %v31
  %v38 = vpop.permute.xlu0 %37
  %41 = vset.pattern.permute.xlu0 0
  %42 = vperm.xlu0 %41, %v32
  %v43 = vpop.permute.xlu0 %42
  %46 = vset.pattern.permute.xlu0 0
  %47 = vperm.xlu0 %46, %v33
  %v48 = vpop.permute.xlu0 %47
  %51 = vset.pattern.permute.xlu0 0
  %52 = vperm.xlu0 %51, %v34
  %v53 = vpop.permute.xlu0 %52
  %vm55 = vcmask 31744
  %v57 = vsel %vm55, %v27, 0
  %v60 = vsel %vm55, %v28, 0
  %v63 = vsel %vm55, %v29, 0
  %v66 = vsel %vm55, %v30, 0
  %v69 = vsel %vm55, %v26, 0
  %71 = vmatprep.subr.mxu0 0.0
  %72 = vmatpush1.xpose.msra.mxu0 %v69
  %73 = vmatprep.subr.mxu0 0.0
  %74 = vmatpush1.xpose.msra.mxu0 0.0
  %75 = vmatprep.subr.mxu0 0.0
  %76 = vmatpush1.xpose.msra.mxu0 0.0
  %77 = vmatprep.subr.mxu0 0.0
  %78 = vmatpush1.xpose.msra.mxu0 0.0
  %79 = vmatprep.subr.mxu0 0.0
  %80 = vmatpush1.xpose.msra.mxu0 0.0
  %81 = vmatprep.subr.mxu0 0.0
  %82 = vmatpush1.xpose.msra.mxu0 0.0
  %83 = vmatprep.subr.mxu0 0.0
  %84 = vmatpush1.xpose.msra.mxu0 0.0
  %85 = vmatprep.subr.mxu0 0.0
  %86 = vmatpush1.xpose.msra.mxu0 0.0
  %87 = vmatprep.subr.mxu0 0.0
  %88 = vmatpush1.xpose.msra.mxu0 0.0
  %89 = vmatprep.subr.mxu0 0.0
  %90 = vmatpush1.xpose.msra.mxu0 0.0
  %91 = vmatprep.subr.mxu0 0.0
  %92 = vmatpush1.xpose.msra.mxu0 0.0
  %93 = vmatprep.subr.mxu0 0.0
  %94 = vmatpush1.xpose.msra.mxu0 0.0
  %95 = vmatprep.subr.mxu0 0.0
  %96 = vmatpush1.xpose.msra.mxu0 0.0
  %97 = vmatprep.subr.mxu0 0.0
  %98 = vmatpush1.xpose.msra.mxu0 0.0
  %99 = vmatprep.subr.mxu0 0.0
  %100 = vmatpush1.xpose.msra.mxu0 0.0
  %101 = vmatprep.subr.mxu0 0.0
  %102 = vmatpush1.xpose.msra.mxu0 0.0
  %103 = vmatprep.subr.mxu0 0.0
  %104 = vmatpush1.xpose.msra.mxu0 0.0
  %105 = vmatprep.subr.mxu0 0.0
  %106 = vmatpush1.xpose.msra.mxu0 0.0
  %107 = vmatprep.subr.mxu0 0.0
  %108 = vmatpush1.xpose.msra.mxu0 0.0
  %109 = vmatprep.subr.mxu0 0.0
  %110 = vmatpush1.xpose.msra.mxu0 0.0
  %111 = vmatprep.subr.mxu0 0.0
  %112 = vmatpush1.xpose.msra.mxu0 0.0
  %113 = vmatprep.subr.mxu0 0.0
  %114 = vmatpush1.xpose.msra.mxu0 0.0
  %115 = vmatprep.subr.mxu0 0.0
  %116 = vmatpush1.xpose.msra.mxu0 0.0
  %117 = vmatprep.subr.mxu0 0.0
  %118 = vmatpush1.xpose.msra.mxu0 0.0
  %119 = vmatprep.subr.mxu0 0.0
  %120 = vmatpush1.xpose.msra.mxu0 0.0
  %121 = vmatprep.subr.mxu0 0.0
  %122 = vmatpush1.xpose.msra.mxu0 0.0
  %123 = vmatprep.subr.mxu0 0.0
  %124 = vmatpush1.xpose.msra.mxu0 0.0
  %125 = vmatprep.subr.mxu0 0.0
  %126 = vmatpush1.xpose.msra.mxu0 0.0
  %127 = vmatprep.subr.mxu0 0.0
  %128 = vmatpush1.xpose.msra.mxu0 0.0
  %129 = vmatprep.subr.mxu0 0.0
  %130 = vmatpush1.xpose.msra.mxu0 0.0
  %131 = vmatprep.subr.mxu0 0.0
  %132 = vmatpush1.xpose.msra.mxu0 0.0
  %133 = vmatprep.subr.mxu0 0.0
  %134 = vmatpush1.xpose.msra.mxu0 0.0
  %135 = vmatprep.mubr.f32.mxu0 0.0
  %136 = vmatmul.mubr.f32.gmra.mrb[0].mxu0 %v57
  %v137 = vpop.f32.mrb[0].mxu0
  %v138 = vadd.f32 %v38, %v137
  %v139 = vpop.f32.mrb[0].mxu0
  %140 = vmatprep.mubr.f32.mxu0 0.0
  %141 = vmatmul.mubr.f32.gmra.mrb[0].mxu0 %v60
  %v142 = vpop.f32.mrb[0].mxu0
  %v143 = vadd.f32 %v43, %v142
  %v144 = vpop.f32.mrb[0].mxu0
  %145 = vmatprep.mubr.f32.mxu0 0.0
  %146 = vmatmul.mubr.f32.gmra.mrb[0].mxu0 %v63
  %v147 = vpop.f32.mrb[0].mxu0
  %v148 = vadd.f32 %v48, %v147
  %v149 = vpop.f32.mrb[0].mxu0
  %150 = vmatprep.mubr.f32.mxu0 0.0
  %151 = vmatmul.mubr.f32.gmra.mrb[0].mxu0 %v66
  %v152 = vpop.f32.mrb[0].mxu0
  %v153 = vadd.f32 %v53, %v152
  %v154 = vpop.f32.mrb[0].mxu0
  %155 = vdwg.mxu0
  %v156 = vmul.f32 %v138, 0.5
  %v157 = vmul.f32 %v143, 0.5
  %v158 = vmul.f32 %v148, 0.5
  %v159 = vmul.f32 %v153, 0.5
  %v160 = vtanh.pop %v156
  %v161 = vtanh.pop %v157
  %v162 = vtanh.pop %v158
  %v163 = vtanh.pop %v159
  %v164 = vmul.f32 %v160, 0.5
  %v165 = vmul.f32 %v161, 0.5
  %v166 = vmul.f32 %v162, 0.5
  %v167 = vmul.f32 %v163, 0.5
  %v168 = vadd.f32 %v164, 0.5
  %v169 = vadd.f32 %v165, 0.5
  %v170 = vadd.f32 %v166, 0.5
  %v171 = vadd.f32 %v167, 0.5
  %v172 = vmul.f32 %v138, %v168
  %v173 = vmul.f32 %v143, %v169
  %v174 = vmul.f32 %v148, %v170
  %v175 = vmul.f32 %v153, %v171
  %v176 = vld [vmem:[%s3] sm:$0xff]
  %v177 = vld [vmem:[%s3 + $0x8] sm:$0xff]
  %v178 = vld [vmem:[%s3 + $0x10] sm:$0xff]
  %v179 = vld [vmem:[%s3 + $0x18] sm:$0xff]
  %v180 = vld [vmem:[%s4] sm:$0xff]
  %v181 = vld [vmem:[%s4 + $0x8] sm:$0xff]
  %v182 = vld [vmem:[%s4 + $0x10] sm:$0xff]
  %v183 = vld [vmem:[%s4 + $0x18] sm:$0xff]
  %185 = vset.pattern.permute.xlu0 0
  %186 = vperm.xlu0 %185, %v180
  %v187 = vpop.permute.xlu0 %186
  %190 = vset.pattern.permute.xlu0 0
  %191 = vperm.xlu0 %190, %v181
  %v192 = vpop.permute.xlu0 %191
  %195 = vset.pattern.permute.xlu0 0
  %196 = vperm.xlu0 %195, %v182
  %v197 = vpop.permute.xlu0 %196
  %200 = vset.pattern.permute.xlu0 0
  %201 = vperm.xlu0 %200, %v183
  %v202 = vpop.permute.xlu0 %201
  %vm204 = vcmask 261120
  %v206 = vsel %vm204, %v176, 0
  %v209 = vsel %vm204, %v177, 0
  %v212 = vsel %vm204, %v178, 0
  %v215 = vsel %vm204, %v179, 0
  %217 = vmatprep.subr.mxu0 0.0
  %218 = vmatpush1.msra.mxu0 %v172
  %219 = vmatprep.subr.mxu0 0.0
  %220 = vmatpush1.msra.mxu0 %v173
  %221 = vmatprep.subr.mxu0 0.0
  %222 = vmatpush1.msra.mxu0 %v174
  %223 = vmatprep.subr.mxu0 0.0
  %224 = vmatpush1.msra.mxu0 %v175
  %225 = vmatprep.subr.mxu0 0.0
  %226 = vmatpush1.msra.mxu0 0.0
  %227 = vmatprep.subr.mxu0 0.0
  %228 = vmatpush1.msra.mxu0 0.0
  %229 = vmatprep.subr.mxu0 0.0
  %230 = vmatpush1.msra.mxu0 0.0
  %231 = vmatprep.subr.mxu0 0.0
  %232 = vmatpush1.msra.mxu0 0.0
  %233 = vmatprep.subr.mxu0 0.0
  %234 = vmatpush1.msra.mxu0 0.0
  %235 = vmatprep.subr.mxu0 0.0
  %236 = vmatpush1.msra.mxu0 0.0
  %237 = vmatprep.subr.mxu0 0.0
  %238 = vmatpush1.msra.mxu0 0.0
  %239 = vmatprep.subr.mxu0 0.0
  %240 = vmatpush1.msra.mxu0 0.0
  %241 = vmatprep.subr.mxu0 0.0
  %242 = vmatpush1.msra.mxu0 0.0
  %243 = vmatprep.subr.mxu0 0.0
  %244 = vmatpush1.msra.mxu0 0.0
  %245 = vmatprep.subr.mxu0 0.0
  %246 = vmatpush1.msra.mxu0 0.0
  %247 = vmatprep.subr.mxu0 0.0
  %248 = vmatpush1.msra.mxu0 0.0
  %249 = vmatprep.subr.mxu0 0.0
  %250 = vmatpush1.msra.mxu0 0.0
  %251 = vmatprep.subr.mxu0 0.0
  %252 = vmatpush1.msra.mxu0 0.0
  %253 = vmatprep.subr.mxu0 0.0
  %254 = vmatpush1.msra.mxu0 0.0
  %255 = vmatprep.subr.mxu0 0.0
  %256 = vmatpush1.msra.mxu0 0.0
  %257 = vmatprep.subr.mxu0 0.0
  %258 = vmatpush1.msra.mxu0 0.0
  %259 = vmatprep.subr.mxu0 0.0
  %260 = vmatpush1.msra.mxu0 0.0
  %261 = vmatprep.subr.mxu0 0.0
  %262 = vmatpush1.msra.mxu0 0.0
  %263 = vmatprep.subr.mxu0 0.0
  %264 = vmatpush1.msra.mxu0 0.0
  %265 = vmatprep.subr.mxu0 0.0
  %266 = vmatpush1.msra.mxu0 0.0
  %267 = vmatprep.subr.mxu0 0.0
  %268 = vmatpush1.msra.mxu0 0.0
  %269 = vmatprep.subr.mxu0 0.0
  %270 = vmatpush1.msra.mxu0 0.0
  %271 = vmatprep.subr.mxu0 0.0
  %272 = vmatpush1.msra.mxu0 0.0
  %273 = vmatprep.subr.mxu0 0.0
  %274 = vmatpush1.msra.mxu0 0.0
  %275 = vmatprep.subr.mxu0 0.0
  %276 = vmatpush1.msra.mxu0 0.0
  %277 = vmatprep.subr.mxu0 0.0
  %278 = vmatpush1.msra.mxu0 0.0
  %279 = vmatprep.subr.mxu0 0.0
  %280 = vmatpush1.msra.mxu0 0.0
  %281 = vmatprep.mubr.f32.mxu0 0.0
  %282 = vmatmul.mubr.f32.gmra.mrb[0].mxu0 %v206
  %v283 = vpop.f32.mrb[0].mxu0
  %v284 = vadd.f32 %v187, %v283
  %v285 = vpop.f32.mrb[0].mxu0
  %286 = vmatprep.mubr.f32.mxu0 0.0
  %287 = vmatmul.mubr.f32.gmra.mrb[0].mxu0 %v209
  %v288 = vpop.f32.mrb[0].mxu0
  %v289 = vadd.f32 %v192, %v288
  %v290 = vpop.f32.mrb[0].mxu0
  %291 = vmatprep.mubr.f32.mxu0 0.0
  %292 = vmatmul.mubr.f32.gmra.mrb[0].mxu0 %v212
  %v293 = vpop.f32.mrb[0].mxu0
  %v294 = vadd.f32 %v197, %v293
  %v295 = vpop.f32.mrb[0].mxu0
  %296 = vmatprep.mubr.f32.mxu0 0.0
  %297 = vmatmul.mubr.f32.gmra.mrb[0].mxu0 %v215
  %v298 = vpop.f32.mrb[0].mxu0
  %v299 = vadd.f32 %v202, %v298
  %v300 = vpop.f32.mrb[0].mxu0
  %301 = vdwg.mxu0
  %v302 = vmul.f32 %v284, 0.5
  %v303 = vmul.f32 %v289, 0.5
  %v304 = vmul.f32 %v294, 0.5
  %v305 = vmul.f32 %v299, 0.5
  %v306 = vtanh.pop %v302
  %v307 = vtanh.pop %v303
  %v308 = vtanh.pop %v304
  %v309 = vtanh.pop %v305
  %v310 = vmul.f32 %v306, 0.5
  %v311 = vmul.f32 %v307, 0.5
  %v312 = vmul.f32 %v308, 0.5
  %v313 = vmul.f32 %v309, 0.5
  %v314 = vadd.f32 %v310, 0.5
  %v315 = vadd.f32 %v311, 0.5
  %v316 = vadd.f32 %v312, 0.5
  %v317 = vadd.f32 %v313, 0.5
  %v318 = vmul.f32 %v284, %v314
  %v319 = vmul.f32 %v289, %v315
  %v320 = vmul.f32 %v294, %v316
  %v321 = vmul.f32 %v299, %v317
  %v322 = vld [vmem:[%s5] sm:$0xff]
  %v323 = vld [vmem:[%s5 + $0x8] sm:$0xff]
  %v324 = vld [vmem:[%s5 + $0x10] sm:$0xff]
  %v325 = vld [vmem:[%s5 + $0x18] sm:$0xff]
  %v326 = vld [vmem:[%s6] sm:$0x1]
  %v328 = vlaneseq
  %v329 = vshrl.u32 %v328, 7
  %v330 = vsub.s32 0, %v329
  %v331 = vrot.slane %v326, %v330
  %333 = vxpose.xlu0.b32.start [1/16] %v318, 128
  %334 = vxpose.xlu0.b32.cont [2/16] %v319, 128
  %335 = vxpose.xlu0.b32.cont [3/16] %v320, 128
  %336 = vxpose.xlu0.b32.cont [4/16] %v321, 128
  %337 = vxpose.xlu0.b32.cont [5/16] 0.0, 128
  %338 = vxpose.xlu0.b32.cont [6/16] 0.0, 128
  %339 = vxpose.xlu0.b32.cont [7/16] 0.0, 128
  %340 = vxpose.xlu0.b32.cont [8/16] 0.0, 128
  %341 = vxpose.xlu0.b32.cont [9/16] 0.0, 128
  %342 = vxpose.xlu0.b32.cont [10/16] 0.0, 128
  %343 = vxpose.xlu0.b32.cont [11/16] 0.0, 128
  %344 = vxpose.xlu0.b32.cont [12/16] 0.0, 128
  %345 = vxpose.xlu0.b32.cont [13/16] 0.0, 128
  %346 = vxpose.xlu0.b32.cont [14/16] 0.0, 128
  %347 = vxpose.xlu0.b32.cont [15/16] 0.0, 128
  %348 = vxpose.xlu0.b32.end [16/16] 0.0, 128
  %v349 = vpop.trf.xlu0
  %v350 = vpop.trf.xlu0
  %v351 = vpop.trf.xlu0
  %v352 = vpop.trf.xlu0
  %v353 = vpop.trf.xlu0
  %v354 = vpop.trf.xlu0
  %v355 = vpop.trf.xlu0
  %v356 = vpop.trf.xlu0
  %v357 = vpop.trf.xlu0
  %v358 = vpop.trf.xlu0
  %v359 = vpop.trf.xlu0
  %v360 = vpop.trf.xlu0
  %v361 = vpop.trf.xlu0
  %v362 = vpop.trf.xlu0
  %v363 = vpop.trf.xlu0
  %v364 = vpop.trf.xlu0
  %v366 = vsel %vm204, %v349, 0
  %368 = vmatprep.subr.mxu0 0.0
  %369 = vmatpush1.msra.mxu0 %v322
  %370 = vmatprep.subr.mxu0 0.0
  %371 = vmatpush1.msra.mxu0 %v323
  %372 = vmatprep.subr.mxu0 0.0
  %373 = vmatpush1.msra.mxu0 %v324
  %374 = vmatprep.subr.mxu0 0.0
  %375 = vmatpush1.msra.mxu0 %v325
  %376 = vmatprep.subr.mxu0 0.0
  %377 = vmatpush1.msra.mxu0 0.0
  %378 = vmatprep.subr.mxu0 0.0
  %379 = vmatpush1.msra.mxu0 0.0
  %380 = vmatprep.subr.mxu0 0.0
  %381 = vmatpush1.msra.mxu0 0.0
  %382 = vmatprep.subr.mxu0 0.0
  %383 = vmatpush1.msra.mxu0 0.0
  %384 = vmatprep.subr.mxu0 0.0
  %385 = vmatpush1.msra.mxu0 0.0
  %386 = vmatprep.subr.mxu0 0.0
  %387 = vmatpush1.msra.mxu0 0.0
  %388 = vmatprep.subr.mxu0 0.0
  %389 = vmatpush1.msra.mxu0 0.0
  %390 = vmatprep.subr.mxu0 0.0
  %391 = vmatpush1.msra.mxu0 0.0
  %392 = vmatprep.subr.mxu0 0.0
  %393 = vmatpush1.msra.mxu0 0.0
  %394 = vmatprep.subr.mxu0 0.0
  %395 = vmatpush1.msra.mxu0 0.0
  %396 = vmatprep.subr.mxu0 0.0
  %397 = vmatpush1.msra.mxu0 0.0
  %398 = vmatprep.subr.mxu0 0.0
  %399 = vmatpush1.msra.mxu0 0.0
  %400 = vmatprep.subr.mxu0 0.0
  %401 = vmatpush1.msra.mxu0 0.0
  %402 = vmatprep.subr.mxu0 0.0
  %403 = vmatpush1.msra.mxu0 0.0
  %404 = vmatprep.subr.mxu0 0.0
  %405 = vmatpush1.msra.mxu0 0.0
  %406 = vmatprep.subr.mxu0 0.0
  %407 = vmatpush1.msra.mxu0 0.0
  %408 = vmatprep.subr.mxu0 0.0
  %409 = vmatpush1.msra.mxu0 0.0
  %410 = vmatprep.subr.mxu0 0.0
  %411 = vmatpush1.msra.mxu0 0.0
  %412 = vmatprep.subr.mxu0 0.0
  %413 = vmatpush1.msra.mxu0 0.0
  %414 = vmatprep.subr.mxu0 0.0
  %415 = vmatpush1.msra.mxu0 0.0
  %416 = vmatprep.subr.mxu0 0.0
  %417 = vmatpush1.msra.mxu0 0.0
  %418 = vmatprep.subr.mxu0 0.0
  %419 = vmatpush1.msra.mxu0 0.0
  %420 = vmatprep.subr.mxu0 0.0
  %421 = vmatpush1.msra.mxu0 0.0
  %422 = vmatprep.subr.mxu0 0.0
  %423 = vmatpush1.msra.mxu0 0.0
  %424 = vmatprep.subr.mxu0 0.0
  %425 = vmatpush1.msra.mxu0 0.0
  %426 = vmatprep.subr.mxu0 0.0
  %427 = vmatpush1.msra.mxu0 0.0
  %428 = vmatprep.subr.mxu0 0.0
  %429 = vmatpush1.msra.mxu0 0.0
  %430 = vmatprep.subr.mxu0 0.0
  %431 = vmatpush1.msra.mxu0 0.0
  %432 = vmatprep.mubr.f32.mxu0 0.0
  %433 = vmatmul.mubr.f32.gmra.mrb[0].mxu0 %v366
  %v434 = vpop.f32.mrb[0].mxu0
  %v435 = vadd.f32 %v331, %v434
  %v436 = vpop.f32.mrb[0].mxu0
  %437 = vdwg.mxu0
  %vm438 = vcmask 23552
  %439 = vst.msk [vmem:[%s7] sm:$0xff] %vm438, %v435
  // Predicated region
  $region30: #{tpu_custom_call.1} parent=0 // pred_check
    _
  $region31: #{tpu_custom_call.1} parent=0 // pred_check_branch
    %441 = sbr.rel (0) target = $region33
  $region32: #{tpu_custom_call.1} parent=0 // pred_region
    _
  $region33: #{tpu_custom_call.1} parent=0 // pred_fallthru
    _
  // Predicated region
  $region34: #{tpu_custom_call.1} parent=0 // pred_check
    _
  $region35: #{tpu_custom_call.1} parent=0 // pred_check_branch
    %443 = sbr.rel (0) target = $region37
  $region36: #{tpu_custom_call.1} parent=0 // pred_region
    _
  $region37: #{tpu_custom_call.1} parent=0 // pred_fallthru
    _

</llo_original>
